<compile_context>
chip_gen: v7x
topology: tpu7x:2x2x1
jax: 0.10.0
libtpu: 0.0.40
codegen_flags: <defaults>
</compile_context>

<pallas_src>
import functools

import jax
import jax.numpy as jnp
from jax.experimental import pallas as pl
from jax.experimental.pallas import tpu as pltpu

NEG_SLOPE = 0.01  # PyTorch nn.LeakyReLU default negative_slope


def _leaky_relu(x):
    # mul + max instead of cmp + mul + select (one fewer VPU op per element).
    return jnp.maximum(x, NEG_SLOPE * x)


def _odefunc_kernel(x_ref, w_in_ref, b_in_ref, w_hid_ref, b_hid_ref,
                    w_out_ref, b_out_ref, o_ref, *, n_layers):
    """Whole MLP fused; one batch tile per grid step.

    x_ref  : (tile_b, n_inputs)  -- natural layout from HBM
    o_ref  : (tile_b, n_inputs)
    Internally activations are carried as (features, tile_b): batch on lanes,
    so every VPU op / store on the activation stream is lane-dense.
    """
    wdt = w_in_ref.dtype

    # Input layer (NT): (n_units, n_inputs) . (tile_b, n_inputs)^T -> (n_units, tile_b)
    h = jax.lax.dot_general(
        w_in_ref[...], x_ref[...].astype(wdt),
        dimension_numbers=(((1,), (1,)), ((), ())),
        preferred_element_type=jnp.float32) + b_in_ref[...]

    # Hidden blocks (NN): LeakyReLU -> (n_units, n_units) @ (n_units, tile_b)
    for l in range(n_layers):  # small static trip count -> unrolled
        h = _leaky_relu(h)
        h = jax.lax.dot_general(
            w_hid_ref[l], h.astype(wdt),
            dimension_numbers=(((1,), (0,)), ((), ())),
            preferred_element_type=jnp.float32) + b_hid_ref[l]

    # Final LeakyReLU -> output projection (TN):
    # (n_units, tile_b)^T . (n_units, n_inputs) -> (tile_b, n_inputs)
    h = _leaky_relu(h)
    out = jax.lax.dot_general(
        h.astype(wdt), w_out_ref[...],
        dimension_numbers=(((0,), (0,)), ((), ())),
        preferred_element_type=jnp.float32) + b_out_ref[...]

    o_ref[...] = out.astype(o_ref.dtype)


def _pick_tile(B, requested):
    """Batch tile selection.

    Whole batch in one grid step when it fits one tile (single-TC v5e/v6e pay
    only one ~0.35us step cost; small batches on v7x are overhead-bound anyway).
    Otherwise use a multiple-of-256 tile (full 256-wide MXU output passes on
    v6e/v7x) with a ragged, masked final block -- no wrapper padding.
    """
    cap = max(256, (int(requested) // 256) * 256)
    if B <= cap:
        return B, 1
    return cap, int(pl.cdiv(B, cap))


def odefunc_forward(x, params, *, tile_b=4096):
    """Pallas equivalent of odefunc.forward(x).  x: (B, n_inputs) -> (B, n_inputs)."""
    w_in, b_in, w_hid, b_hid, w_out, b_out = params
    B, n_inputs = x.shape
    n_layers, n_units, _ = w_hid.shape

    tile, steps = _pick_tile(B, tile_b)
    kernel = functools.partial(_odefunc_kernel, n_layers=n_layers)

    flops = 2 * B * (n_inputs * n_units
                     + n_layers * n_units * n_units
                     + n_units * n_inputs)
    param_bytes = sum(int(p.size) * p.dtype.itemsize for p in params)
    bytes_accessed = 2 * B * n_inputs * x.dtype.itemsize + param_bytes

    return pl.pallas_call(
        kernel,
        out_shape=jax.ShapeDtypeStruct((B, n_inputs), x.dtype),
        grid_spec=pltpu.PrefetchScalarGridSpec(
            num_scalar_prefetch=0,
            grid=(steps,),
            in_specs=[
                pl.BlockSpec((tile, n_inputs), lambda i: (i, 0)),            # x
                pl.BlockSpec((n_units, n_inputs), lambda i: (0, 0)),         # W_in
                pl.BlockSpec((n_units, 1), lambda i: (0, 0)),                # b_in
                pl.BlockSpec((n_layers, n_units, n_units),
                             lambda i: (0, 0, 0)),                           # W_hid
                pl.BlockSpec((n_layers, n_units, 1), lambda i: (0, 0, 0)),   # b_hid
                pl.BlockSpec((n_units, n_inputs), lambda i: (0, 0)),         # W_out^T
                pl.BlockSpec((1, n_inputs), lambda i: (0, 0)),               # b_out
            ],
            out_specs=pl.BlockSpec((tile, n_inputs), lambda i: (i, 0)),
        ),
        compiler_params=pltpu.CompilerParams(
            dimension_semantics=("parallel",)),
        cost_estimate=pl.CostEstimate(
            flops=int(flops), transcendentals=0,
            bytes_accessed=int(bytes_accessed)),
    )(x, w_in, b_in, w_hid, b_hid, w_out, b_out)


def init_params(key, n_inputs, n_layers, n_units, dtype=jnp.float32):
    """Synthetic parameters.  w_in/w_hid in PyTorch (out, in) layout; w_out is
    stored pre-transposed as (n_units, n_inputs) (== torch_w_out.T, done once)."""
    ks = jax.random.split(key, 6)
    w_in = jax.random.normal(ks[0], (n_units, n_inputs), dtype) * 0.2
    b_in = jax.random.normal(ks[1], (n_units, 1), dtype) * 0.1
    w_hid = jax.random.normal(ks[2], (n_layers, n_units, n_units), dtype) * 0.2
    b_hid = jax.random.normal(ks[3], (n_layers, n_units, 1), dtype) * 0.1
    w_out = jax.random.normal(ks[4], (n_units, n_inputs), dtype) * 0.2
    b_out = jax.random.normal(ks[5], (1, n_inputs), dtype) * 0.1
    return (w_in, b_in, w_hid, b_hid, w_out, b_out)


def odefunc_reference(x, params):
    """Plain-JAX reference in standard (batch, features) layout."""
    w_in, b_in, w_hid, b_hid, w_out, b_out = params
    h = x @ w_in.T + b_in[:, 0]
    for l in range(w_hid.shape[0]):
        h = _leaky_relu(h)
        h = h @ w_hid[l].T + b_hid[l, :, 0]
    h = _leaky_relu(h)
    return h @ w_out + b_out[0]


if __name__ == "__main__":
    n_inputs, n_layers, n_units = 8, 2, 32

    key = jax.random.PRNGKey(0)
    k_params, k_x = jax.random.split(key)
    params = init_params(k_params, n_inputs, n_layers, n_units)

    # 1) small batch, single grid step (typical ODE-solver call)
    x = jax.random.normal(k_x, (16, n_inputs), jnp.float32)
    out = jax.block_until_ready(odefunc_forward(x, params))
    ref = odefunc_reference(x, params)
    assert out.shape == (16, n_inputs)
    assert jnp.allclose(out, ref, rtol=1e-3, atol=1e-3)

    # 2) multi-step grid with a ragged (masked) final block, no padding/transpose
    x_big = jax.random.normal(k_x, (1000, n_inputs), jnp.float32)
    out_big = jax.block_until_ready(odefunc_forward(x_big, params, tile_b=256))
    ref_big = odefunc_reference(x_big, params)
    assert jnp.allclose(out_big, ref_big, rtol=1e-3, atol=1e-3)

    # 3) bf16 streaming path (halves HBM traffic on v6e/v7x), f32 accumulation
    x_bf = x_big.astype(jnp.bfloat16)
    params_bf = jax.tree_util.tree_map(lambda p: p.astype(jnp.bfloat16), params)
    out_bf = jax.block_until_ready(odefunc_forward(x_bf, params_bf, tile_b=512))
    assert out_bf.dtype == jnp.bfloat16
    assert jnp.allclose(out_bf.astype(jnp.float32), ref_big, rtol=6e-2, atol=6e-2)

    print("KERNEL_OK")
</pallas_src>

<mosaic_0001>
module attributes {stable_mosaic.version = 11 : i64} {
  func.func @_odefunc_kernel(%arg0: i32, %arg1: memref<16x8xf32, #tpu.memory_space<vmem>>, %arg2: memref<32x8xf32, #tpu.memory_space<vmem>>, %arg3: memref<32x1xf32, #tpu.memory_space<vmem>>, %arg4: memref<2x32x32xf32, #tpu.memory_space<vmem>>, %arg5: memref<2x32x1xf32, #tpu.memory_space<vmem>>, %arg6: memref<32x8xf32, #tpu.memory_space<vmem>>, %arg7: memref<1x8xf32, #tpu.memory_space<vmem>>, %arg8: memref<16x8xf32, #tpu.memory_space<vmem>>) attributes {dimension_semantics = [#tpu.dimension_semantics<parallel>], iteration_bounds = array<i64: 1>, scalar_prefetch = 0 : i64, scratch_operands = 0 : i64, tpu.core_type = #tpu.core_type<tc>, window_params = [{transform_indices = @transform_0, window_bounds = array<i64: 16, 8>}, {pipeline_mode = #tpu.pipeline_mode<synchronous>, transform_indices = @transform_1, window_bounds = array<i64: 32, 8>}, {pipeline_mode = #tpu.pipeline_mode<synchronous>, transform_indices = @transform_2, window_bounds = array<i64: 32, 1>}, {pipeline_mode = #tpu.pipeline_mode<synchronous>, transform_indices = @transform_3, window_bounds = array<i64: 2, 32, 32>}, {pipeline_mode = #tpu.pipeline_mode<synchronous>, transform_indices = @transform_4, window_bounds = array<i64: 2, 32, 1>}, {pipeline_mode = #tpu.pipeline_mode<synchronous>, transform_indices = @transform_5, window_bounds = array<i64: 32, 8>}, {pipeline_mode = #tpu.pipeline_mode<synchronous>, transform_indices = @transform_6, window_bounds = array<i64: 1, 8>}, {transform_indices = @transform_7, window_bounds = array<i64: 16, 8>}]} {
    %c0 = arith.constant 0 : index
    %c0_0 = arith.constant 0 : index
    %0 = vector.load %arg2[%c0, %c0_0] : memref<32x8xf32, #tpu.memory_space<vmem>>, vector<32x8xf32>
    %c0_1 = arith.constant 0 : index
    %c0_2 = arith.constant 0 : index
    %1 = vector.load %arg1[%c0_1, %c0_2] : memref<16x8xf32, #tpu.memory_space<vmem>>, vector<16x8xf32>
    %cst = arith.constant dense<0.000000e+00> : vector<32x16xf32>
    %2 = tpu.matmul %0, %1, %cst {dimension_numbers = #tpu.dot_dimension_numbers<[1], [1], [0], [0], [0, 0, 1, 0], [], []>} : vector<32x8xf32>, vector<16x8xf32>, vector<32x16xf32> -> vector<32x16xf32>
    %c0_3 = arith.constant 0 : index
    %c0_4 = arith.constant 0 : index
    %3 = vector.load %arg3[%c0_3, %c0_4] : memref<32x1xf32, #tpu.memory_space<vmem>>, vector<32x1xf32>
    %4 = vector.broadcast %3 : vector<32x1xf32> to vector<32x16xf32>
    %5 = arith.addf %2, %4 : vector<32x16xf32>
    %cst_5 = arith.constant 0.00999999977 : f32
    %6 = vector.broadcast %cst_5 : f32 to vector<32x16xf32>
    %7 = arith.mulf %6, %5 : vector<32x16xf32>
    %8 = arith.maximumf %5, %7 : vector<32x16xf32>
    %c0_6 = arith.constant 0 : index
    %c0_7 = arith.constant 0 : index
    %c0_8 = arith.constant 0 : index
    %9 = vector.load %arg4[%c0_6, %c0_7, %c0_8] : memref<2x32x32xf32, #tpu.memory_space<vmem>>, vector<1x32x32xf32>
    %10 = vector.shape_cast %9 : vector<1x32x32xf32> to vector<32x32xf32>
    %cst_9 = arith.constant dense<0.000000e+00> : vector<32x16xf32>
    %11 = tpu.matmul %10, %8, %cst_9 {dimension_numbers = #tpu.dot_dimension_numbers<[1], [0], [0], [1], [0, 0, 1, 1], [], []>} : vector<32x32xf32>, vector<32x16xf32>, vector<32x16xf32> -> vector<32x16xf32>
    %c0_10 = arith.constant 0 : index
    %c0_11 = arith.constant 0 : index
    %c0_12 = arith.constant 0 : index
    %12 = vector.load %arg5[%c0_10, %c0_11, %c0_12] : memref<2x32x1xf32, #tpu.memory_space<vmem>>, vector<1x32x1xf32>
    %13 = vector.shape_cast %12 : vector<1x32x1xf32> to vector<32x1xf32>
    %14 = vector.broadcast %13 : vector<32x1xf32> to vector<32x16xf32>
    %15 = arith.addf %11, %14 : vector<32x16xf32>
    %cst_13 = arith.constant 0.00999999977 : f32
    %16 = vector.broadcast %cst_13 : f32 to vector<32x16xf32>
    %17 = arith.mulf %16, %15 : vector<32x16xf32>
    %18 = arith.maximumf %15, %17 : vector<32x16xf32>
    %c1 = arith.constant 1 : index
    %c0_14 = arith.constant 0 : index
    %c0_15 = arith.constant 0 : index
    %19 = vector.load %arg4[%c1, %c0_14, %c0_15] : memref<2x32x32xf32, #tpu.memory_space<vmem>>, vector<1x32x32xf32>
    %20 = vector.shape_cast %19 : vector<1x32x32xf32> to vector<32x32xf32>
    %cst_16 = arith.constant dense<0.000000e+00> : vector<32x16xf32>
    %21 = tpu.matmul %20, %18, %cst_16 {dimension_numbers = #tpu.dot_dimension_numbers<[1], [0], [0], [1], [0, 0, 1, 1], [], []>} : vector<32x32xf32>, vector<32x16xf32>, vector<32x16xf32> -> vector<32x16xf32>
    %c1_17 = arith.constant 1 : index
    %c0_18 = arith.constant 0 : index
    %c0_19 = arith.constant 0 : index
    %22 = vector.load %arg5[%c1_17, %c0_18, %c0_19] : memref<2x32x1xf32, #tpu.memory_space<vmem>>, vector<1x32x1xf32>
    %23 = vector.shape_cast %22 : vector<1x32x1xf32> to vector<32x1xf32>
    %24 = vector.broadcast %23 : vector<32x1xf32> to vector<32x16xf32>
    %25 = arith.addf %21, %24 : vector<32x16xf32>
    %cst_20 = arith.constant 0.00999999977 : f32
    %26 = vector.broadcast %cst_20 : f32 to vector<32x16xf32>
    %27 = arith.mulf %26, %25 : vector<32x16xf32>
    %28 = arith.maximumf %25, %27 : vector<32x16xf32>
    %c0_21 = arith.constant 0 : index
    %c0_22 = arith.constant 0 : index
    %29 = vector.load %arg6[%c0_21, %c0_22] : memref<32x8xf32, #tpu.memory_space<vmem>>, vector<32x8xf32>
    %cst_23 = arith.constant dense<0.000000e+00> : vector<16x8xf32>
    %30 = tpu.matmul %28, %29, %cst_23 {dimension_numbers = #tpu.dot_dimension_numbers<[0], [0], [1], [1], [0, 1, 1, 1], [], []>} : vector<32x16xf32>, vector<32x8xf32>, vector<16x8xf32> -> vector<16x8xf32>
    %c0_24 = arith.constant 0 : index
    %c0_25 = arith.constant 0 : index
    %31 = vector.load %arg7[%c0_24, %c0_25] : memref<1x8xf32, #tpu.memory_space<vmem>>, vector<1x8xf32>
    %32 = vector.broadcast %31 : vector<1x8xf32> to vector<16x8xf32>
    %33 = arith.addf %30, %32 : vector<16x8xf32>
    %c0_26 = arith.constant 0 : index
    %c0_27 = arith.constant 0 : index
    %34 = vector.load %arg8[%c0_26, %c0_27] : memref<16x8xf32, #tpu.memory_space<vmem>>, vector<16x8xf32>
    tpu.vector_store %arg8[%c0_26, %c0_27], %33 {strides = array<i32>} : memref<16x8xf32, #tpu.memory_space<vmem>>, vector<16x8xf32>,
    return
  }
  func.func @transform_0(%arg0: i32) -> (i32, i32) {
    %c0_i32 = arith.constant 0 : i32
    %c0_i32_0 = arith.constant 0 : i32
    return %arg0, %c0_i32 : i32, i32
  }
  func.func @transform_1(%arg0: i32) -> (i32, i32) {
    %c0_i32 = arith.constant 0 : i32
    %c0_i32_0 = arith.constant 0 : i32
    %c0_i32_1 = arith.constant 0 : i32
    return %c0_i32, %c0_i32_0 : i32, i32
  }
  func.func @transform_2(%arg0: i32) -> (i32, i32) {
    %c0_i32 = arith.constant 0 : i32
    %c0_i32_0 = arith.constant 0 : i32
    %c0_i32_1 = arith.constant 0 : i32
    return %c0_i32, %c0_i32_0 : i32, i32
  }
  func.func @transform_3(%arg0: i32) -> (i32, i32, i32) {
    %c0_i32 = arith.constant 0 : i32
    %c0_i32_0 = arith.constant 0 : i32
    %c0_i32_1 = arith.constant 0 : i32
    %c0_i32_2 = arith.constant 0 : i32
    return %c0_i32, %c0_i32_0, %c0_i32_1 : i32, i32, i32
  }
  func.func @transform_4(%arg0: i32) -> (i32, i32, i32) {
    %c0_i32 = arith.constant 0 : i32
    %c0_i32_0 = arith.constant 0 : i32
    %c0_i32_1 = arith.constant 0 : i32
    %c0_i32_2 = arith.constant 0 : i32
    return %c0_i32, %c0_i32_0, %c0_i32_1 : i32, i32, i32
  }
  func.func @transform_5(%arg0: i32) -> (i32, i32) {
    %c0_i32 = arith.constant 0 : i32
    %c0_i32_0 = arith.constant 0 : i32
    %c0_i32_1 = arith.constant 0 : i32
    return %c0_i32, %c0_i32_0 : i32, i32
  }
  func.func @transform_6(%arg0: i32) -> (i32, i32) {
    %c0_i32 = arith.constant 0 : i32
    %c0_i32_0 = arith.constant 0 : i32
    %c0_i32_1 = arith.constant 0 : i32
    return %c0_i32, %c0_i32_0 : i32, i32
  }
  func.func @transform_7(%arg0: i32) -> (i32, i32) {
    %c0_i32 = arith.constant 0 : i32
    %c0_i32_0 = arith.constant 0 : i32
    return %arg0, %c0_i32 : i32, i32
  }
}

</mosaic_0001>

<llo_original>
// kernel: tpu_custom_call.1
$region0: #{tpu_custom_call.1}
  #allocation0 [shape = 'u32[]', space=smem, size = 0x4, offset = 0x4, fixed_abs, tag = 'smem constant byte address 0x4 - core index']
  #allocation1 [shape = 'u32[144,128]{1,0:T(1,128)}', space=vmem, size = 0x12000, scoped, tag = 'internal scratch']
  %s0 = inlined_call_operand.vmem [shape: f32[16,8], index: 0, kind: input, shape index: {}]
  %s1 = inlined_call_operand.vmem [shape: f32[32,8], index: 1, kind: input, shape index: {}]
  %s2 = inlined_call_operand.vmem [shape: f32[32,1], index: 2, kind: input, shape index: {}]
  %s3 = inlined_call_operand.vmem [shape: f32[2,32,32], index: 3, kind: input, shape index: {}]
  %s4 = inlined_call_operand.vmem [shape: f32[2,32,1], index: 4, kind: input, shape index: {}]
  %s5 = inlined_call_operand.vmem [shape: f32[32,8], index: 5, kind: input, shape index: {}]
  %s6 = inlined_call_operand.vmem [shape: f32[1,8], index: 6, kind: input, shape index: {}]
  %s7 = inlined_call_operand.vmem [shape: f32[16,8], index: 7, kind: output, shape index: {}]
  %s8 = sld [smem:[#allocation0]]
  $region38: #{tpu_custom_call.1} parent=0
    _
  %s10 = ssub.s32 1, %s8
  %s11 = scalar_select 0, %s10, %s8
  // Predicated region
  $region2: #{tpu_custom_call.1} parent=0 // pred_check
    _
  $region3: #{tpu_custom_call.1} parent=0 // pred_check_branch
    %13 = sbr.rel (0) target = $region5
  $region4: #{tpu_custom_call.1} parent=0 // pred_region
    _
  $region5: #{tpu_custom_call.1} parent=0 // pred_fallthru
    _
  // Predicated region
  $region6: #{tpu_custom_call.1} parent=0 // pred_check
    _
  $region7: #{tpu_custom_call.1} parent=0 // pred_check_branch
    %15 = sbr.rel (0) target = $region9
  $region8: #{tpu_custom_call.1} parent=0 // pred_region
    _
  $region9: #{tpu_custom_call.1} parent=0 // pred_fallthru
    _
  // Predicated region
  $region10: #{tpu_custom_call.1} parent=0 // pred_check
    _
  $region11: #{tpu_custom_call.1} parent=0 // pred_check_branch
    %17 = sbr.rel (0) target = $region13
  $region12: #{tpu_custom_call.1} parent=0 // pred_region
    _
  $region13: #{tpu_custom_call.1} parent=0 // pred_fallthru
    _
  // Predicated region
  $region14: #{tpu_custom_call.1} parent=0 // pred_check
    _
  $region15: #{tpu_custom_call.1} parent=0 // pred_check_branch
    %19 = sbr.rel (0) target = $region17
  $region16: #{tpu_custom_call.1} parent=0 // pred_region
    _
  $region17: #{tpu_custom_call.1} parent=0 // pred_fallthru
    _
  // Predicated region
  $region18: #{tpu_custom_call.1} parent=0 // pred_check
    _
  $region19: #{tpu_custom_call.1} parent=0 // pred_check_branch
    %21 = sbr.rel (0) target = $region21
  $region20: #{tpu_custom_call.1} parent=0 // pred_region
    _
  $region21: #{tpu_custom_call.1} parent=0 // pred_fallthru
    _
  // Predicated region
  $region22: #{tpu_custom_call.1} parent=0 // pred_check
    _
  $region23: #{tpu_custom_call.1} parent=0 // pred_check_branch
    %23 = sbr.rel (0) target = $region25
  $region24: #{tpu_custom_call.1} parent=0 // pred_region
    _
  $region25: #{tpu_custom_call.1} parent=0 // pred_fallthru
    _
  // Predicated region
  $region26: #{tpu_custom_call.1} parent=0 // pred_check
    _
  $region27: #{tpu_custom_call.1} parent=0 // pred_check_branch
    %25 = sbr.rel (0) target = $region29
  $region28: #{tpu_custom_call.1} parent=0 // pred_region
    _
  $region29: #{tpu_custom_call.1} parent=0 // pred_fallthru
    _
  %v26 = vld [vmem:[%s1] sm:$0xff]
  %v27 = vld [vmem:[%s1 + $0x8] sm:$0xff]
  %v28 = vld [vmem:[%s1 + $0x10] sm:$0xff]
  %v29 = vld [vmem:[%s1 + $0x18] sm:$0xff]
  %v30 = vld [vmem:[%s0] sm:$0xff]
  %v31 = vld [vmem:[%s0 + $0x8] sm:$0xff]
  %v32 = vld [vmem:[%s2] sm:$0xff]
  %v33 = vld [vmem:[%s2 + $0x8] sm:$0xff]
  %v34 = vld [vmem:[%s2 + $0x10] sm:$0xff]
  %v35 = vld [vmem:[%s2 + $0x18] sm:$0xff]
  %37 = vset.pattern.permute.xlu0 0
  %38 = vperm.xlu0 %37, %v32
  %v39 = vpop.permute.xlu0 %38
  %42 = vset.pattern.permute.xlu0 0
  %43 = vperm.xlu0 %42, %v33
  %v44 = vpop.permute.xlu0 %43
  %47 = vset.pattern.permute.xlu0 0
  %48 = vperm.xlu0 %47, %v34
  %v49 = vpop.permute.xlu0 %48
  %52 = vset.pattern.permute.xlu0 0
  %53 = vperm.xlu0 %52, %v35
  %v54 = vpop.permute.xlu0 %53
  %vm56 = vcmask 64512
  %v58 = vsel %vm56, %v26, 0
  %v61 = vsel %vm56, %v27, 0
  %v64 = vsel %vm56, %v28, 0
  %v67 = vsel %vm56, %v29, 0
  %v70 = vsel %vm56, %v30, 0
  %v73 = vsel %vm56, %v31, 0
  %75 = vmatprep.subr.mxu0 0.0
  %76 = vmatpush1.xpose.msra.mxu0 %v70
  %77 = vmatprep.subr.mxu0 0.0
  %78 = vmatpush1.xpose.msra.mxu0 %v73
  %79 = vmatprep.subr.mxu0 0.0
  %80 = vmatpush1.xpose.msra.mxu0 0.0
  %81 = vmatprep.subr.mxu0 0.0
  %82 = vmatpush1.xpose.msra.mxu0 0.0
  %83 = vmatprep.subr.mxu0 0.0
  %84 = vmatpush1.xpose.msra.mxu0 0.0
  %85 = vmatprep.subr.mxu0 0.0
  %86 = vmatpush1.xpose.msra.mxu0 0.0
  %87 = vmatprep.subr.mxu0 0.0
  %88 = vmatpush1.xpose.msra.mxu0 0.0
  %89 = vmatprep.subr.mxu0 0.0
  %90 = vmatpush1.xpose.msra.mxu0 0.0
  %91 = vmatprep.subr.mxu0 0.0
  %92 = vmatpush1.xpose.msra.mxu0 0.0
  %93 = vmatprep.subr.mxu0 0.0
  %94 = vmatpush1.xpose.msra.mxu0 0.0
  %95 = vmatprep.subr.mxu0 0.0
  %96 = vmatpush1.xpose.msra.mxu0 0.0
  %97 = vmatprep.subr.mxu0 0.0
  %98 = vmatpush1.xpose.msra.mxu0 0.0
  %99 = vmatprep.subr.mxu0 0.0
  %100 = vmatpush1.xpose.msra.mxu0 0.0
  %101 = vmatprep.subr.mxu0 0.0
  %102 = vmatpush1.xpose.msra.mxu0 0.0
  %103 = vmatprep.subr.mxu0 0.0
  %104 = vmatpush1.xpose.msra.mxu0 0.0
  %105 = vmatprep.subr.mxu0 0.0
  %106 = vmatpush1.xpose.msra.mxu0 0.0
  %107 = vmatprep.subr.mxu0 0.0
  %108 = vmatpush1.xpose.msra.mxu0 0.0
  %109 = vmatprep.subr.mxu0 0.0
  %110 = vmatpush1.xpose.msra.mxu0 0.0
  %111 = vmatprep.subr.mxu0 0.0
  %112 = vmatpush1.xpose.msra.mxu0 0.0
  %113 = vmatprep.subr.mxu0 0.0
  %114 = vmatpush1.xpose.msra.mxu0 0.0
  %115 = vmatprep.subr.mxu0 0.0
  %116 = vmatpush1.xpose.msra.mxu0 0.0
  %117 = vmatprep.subr.mxu0 0.0
  %118 = vmatpush1.xpose.msra.mxu0 0.0
  %119 = vmatprep.subr.mxu0 0.0
  %120 = vmatpush1.xpose.msra.mxu0 0.0
  %121 = vmatprep.subr.mxu0 0.0
  %122 = vmatpush1.xpose.msra.mxu0 0.0
  %123 = vmatprep.subr.mxu0 0.0
  %124 = vmatpush1.xpose.msra.mxu0 0.0
  %125 = vmatprep.subr.mxu0 0.0
  %126 = vmatpush1.xpose.msra.mxu0 0.0
  %127 = vmatprep.subr.mxu0 0.0
  %128 = vmatpush1.xpose.msra.mxu0 0.0
  %129 = vmatprep.subr.mxu0 0.0
  %130 = vmatpush1.xpose.msra.mxu0 0.0
  %131 = vmatprep.subr.mxu0 0.0
  %132 = vmatpush1.xpose.msra.mxu0 0.0
  %133 = vmatprep.subr.mxu0 0.0
  %134 = vmatpush1.xpose.msra.mxu0 0.0
  %135 = vmatprep.subr.mxu0 0.0
  %136 = vmatpush1.xpose.msra.mxu0 0.0
  %137 = vmatprep.subr.mxu0 0.0
  %138 = vmatpush1.xpose.msra.mxu0 0.0
  %139 = vmatprep.mubr.f32.mxu0 0.0
  %140 = vmatmul.mubr.f32.gmra.mrb[0].mxu0 %v58
  %v141 = vpop.f32.mrb[0].mxu0
  %v142 = vadd.f32 %v39, %v141
  %v143 = vpop.f32.mrb[0].mxu0
  %144 = vmatprep.mubr.f32.mxu0 0.0
  %145 = vmatmul.mubr.f32.gmra.mrb[0].mxu0 %v61
  %v146 = vpop.f32.mrb[0].mxu0
  %v147 = vadd.f32 %v44, %v146
  %v148 = vpop.f32.mrb[0].mxu0
  %149 = vmatprep.mubr.f32.mxu0 0.0
  %150 = vmatmul.mubr.f32.gmra.mrb[0].mxu0 %v64
  %v151 = vpop.f32.mrb[0].mxu0
  %v152 = vadd.f32 %v49, %v151
  %v153 = vpop.f32.mrb[0].mxu0
  %154 = vmatprep.mubr.f32.mxu0 0.0
  %155 = vmatmul.mubr.f32.gmra.mrb[0].mxu0 %v67
  %v156 = vpop.f32.mrb[0].mxu0
  %v157 = vadd.f32 %v54, %v156
  %v158 = vpop.f32.mrb[0].mxu0
  %159 = vdwg.mxu0
  %v160 = vmul.f32 %v142, 0.01
  %v161 = vmul.f32 %v147, 0.01
  %v162 = vmul.f32 %v152, 0.01
  %v163 = vmul.f32 %v157, 0.01
  %v164 = vmax.f32 %v142, %v160
  %v165 = vmax.f32 %v147, %v161
  %v166 = vmax.f32 %v152, %v162
  %v167 = vmax.f32 %v157, %v163
  %v168 = vld [vmem:[%s3] sm:$0xff]
  %v169 = vld [vmem:[%s3 + $0x8] sm:$0xff]
  %v170 = vld [vmem:[%s3 + $0x10] sm:$0xff]
  %v171 = vld [vmem:[%s3 + $0x18] sm:$0xff]
  %v172 = vld [vmem:[%s4] sm:$0xff]
  %v173 = vld [vmem:[%s4 + $0x8] sm:$0xff]
  %v174 = vld [vmem:[%s4 + $0x10] sm:$0xff]
  %v175 = vld [vmem:[%s4 + $0x18] sm:$0xff]
  %177 = vset.pattern.permute.xlu0 0
  %178 = vperm.xlu0 %177, %v172
  %v179 = vpop.permute.xlu0 %178
  %182 = vset.pattern.permute.xlu0 0
  %183 = vperm.xlu0 %182, %v173
  %v184 = vpop.permute.xlu0 %183
  %187 = vset.pattern.permute.xlu0 0
  %188 = vperm.xlu0 %187, %v174
  %v189 = vpop.permute.xlu0 %188
  %192 = vset.pattern.permute.xlu0 0
  %193 = vperm.xlu0 %192, %v175
  %v194 = vpop.permute.xlu0 %193
  %vm196 = vcmask 261120
  %v198 = vsel %vm196, %v168, 0
  %v201 = vsel %vm196, %v169, 0
  %v204 = vsel %vm196, %v170, 0
  %v207 = vsel %vm196, %v171, 0
  %209 = vmatprep.subr.mxu0 0.0
  %210 = vmatpush1.msra.mxu0 %v164
  %211 = vmatprep.subr.mxu0 0.0
  %212 = vmatpush1.msra.mxu0 %v165
  %213 = vmatprep.subr.mxu0 0.0
  %214 = vmatpush1.msra.mxu0 %v166
  %215 = vmatprep.subr.mxu0 0.0
  %216 = vmatpush1.msra.mxu0 %v167
  %217 = vmatprep.subr.mxu0 0.0
  %218 = vmatpush1.msra.mxu0 0.0
  %219 = vmatprep.subr.mxu0 0.0
  %220 = vmatpush1.msra.mxu0 0.0
  %221 = vmatprep.subr.mxu0 0.0
  %222 = vmatpush1.msra.mxu0 0.0
  %223 = vmatprep.subr.mxu0 0.0
  %224 = vmatpush1.msra.mxu0 0.0
  %225 = vmatprep.subr.mxu0 0.0
  %226 = vmatpush1.msra.mxu0 0.0
  %227 = vmatprep.subr.mxu0 0.0
  %228 = vmatpush1.msra.mxu0 0.0
  %229 = vmatprep.subr.mxu0 0.0
  %230 = vmatpush1.msra.mxu0 0.0
  %231 = vmatprep.subr.mxu0 0.0
  %232 = vmatpush1.msra.mxu0 0.0
  %233 = vmatprep.subr.mxu0 0.0
  %234 = vmatpush1.msra.mxu0 0.0
  %235 = vmatprep.subr.mxu0 0.0
  %236 = vmatpush1.msra.mxu0 0.0
  %237 = vmatprep.subr.mxu0 0.0
  %238 = vmatpush1.msra.mxu0 0.0
  %239 = vmatprep.subr.mxu0 0.0
  %240 = vmatpush1.msra.mxu0 0.0
  %241 = vmatprep.subr.mxu0 0.0
  %242 = vmatpush1.msra.mxu0 0.0
  %243 = vmatprep.subr.mxu0 0.0
  %244 = vmatpush1.msra.mxu0 0.0
  %245 = vmatprep.subr.mxu0 0.0
  %246 = vmatpush1.msra.mxu0 0.0
  %247 = vmatprep.subr.mxu0 0.0
  %248 = vmatpush1.msra.mxu0 0.0
  %249 = vmatprep.subr.mxu0 0.0
  %250 = vmatpush1.msra.mxu0 0.0
  %251 = vmatprep.subr.mxu0 0.0
  %252 = vmatpush1.msra.mxu0 0.0
  %253 = vmatprep.subr.mxu0 0.0
  %254 = vmatpush1.msra.mxu0 0.0
  %255 = vmatprep.subr.mxu0 0.0
  %256 = vmatpush1.msra.mxu0 0.0
  %257 = vmatprep.subr.mxu0 0.0
  %258 = vmatpush1.msra.mxu0 0.0
  %259 = vmatprep.subr.mxu0 0.0
  %260 = vmatpush1.msra.mxu0 0.0
  %261 = vmatprep.subr.mxu0 0.0
  %262 = vmatpush1.msra.mxu0 0.0
  %263 = vmatprep.subr.mxu0 0.0
  %264 = vmatpush1.msra.mxu0 0.0
  %265 = vmatprep.subr.mxu0 0.0
  %266 = vmatpush1.msra.mxu0 0.0
  %267 = vmatprep.subr.mxu0 0.0
  %268 = vmatpush1.msra.mxu0 0.0
  %269 = vmatprep.subr.mxu0 0.0
  %270 = vmatpush1.msra.mxu0 0.0
  %271 = vmatprep.subr.mxu0 0.0
  %272 = vmatpush1.msra.mxu0 0.0
  %273 = vmatprep.mubr.f32.mxu0 0.0
  %274 = vmatmul.mubr.f32.gmra.mrb[0].mxu0 %v198
  %v275 = vpop.f32.mrb[0].mxu0
  %v276 = vadd.f32 %v179, %v275
  %v277 = vpop.f32.mrb[0].mxu0
  %278 = vmatprep.mubr.f32.mxu0 0.0
  %279 = vmatmul.mubr.f32.gmra.mrb[0].mxu0 %v201
  %v280 = vpop.f32.mrb[0].mxu0
  %v281 = vadd.f32 %v184, %v280
  %v282 = vpop.f32.mrb[0].mxu0
  %283 = vmatprep.mubr.f32.mxu0 0.0
  %284 = vmatmul.mubr.f32.gmra.mrb[0].mxu0 %v204
  %v285 = vpop.f32.mrb[0].mxu0
  %v286 = vadd.f32 %v189, %v285
  %v287 = vpop.f32.mrb[0].mxu0
  %288 = vmatprep.mubr.f32.mxu0 0.0
  %289 = vmatmul.mubr.f32.gmra.mrb[0].mxu0 %v207
  %v290 = vpop.f32.mrb[0].mxu0
  %v291 = vadd.f32 %v194, %v290
  %v292 = vpop.f32.mrb[0].mxu0
  %293 = vdwg.mxu0
  %v294 = vmul.f32 %v276, 0.01
  %v295 = vmul.f32 %v281, 0.01
  %v296 = vmul.f32 %v286, 0.01
  %v297 = vmul.f32 %v291, 0.01
  %v298 = vmax.f32 %v276, %v294
  %v299 = vmax.f32 %v281, %v295
  %v300 = vmax.f32 %v286, %v296
  %v301 = vmax.f32 %v291, %v297
  %s302 = scalar_lea.vmem %s3, 32
  %v303 = vld [vmem:[%s302] sm:$0xff]
  %v304 = vld [vmem:[%s302 + $0x8] sm:$0xff]
  %v305 = vld [vmem:[%s302 + $0x10] sm:$0xff]
  %v306 = vld [vmem:[%s302 + $0x18] sm:$0xff]
  %s307 = scalar_lea.vmem %s4, 32
  %v308 = vld [vmem:[%s307] sm:$0xff]
  %v309 = vld [vmem:[%s307 + $0x8] sm:$0xff]
  %v310 = vld [vmem:[%s307 + $0x10] sm:$0xff]
  %v311 = vld [vmem:[%s307 + $0x18] sm:$0xff]
  %313 = vset.pattern.permute.xlu0 0
  %314 = vperm.xlu0 %313, %v308
  %v315 = vpop.permute.xlu0 %314
  %318 = vset.pattern.permute.xlu0 0
  %319 = vperm.xlu0 %318, %v309
  %v320 = vpop.permute.xlu0 %319
  %323 = vset.pattern.permute.xlu0 0
  %324 = vperm.xlu0 %323, %v310
  %v325 = vpop.permute.xlu0 %324
  %328 = vset.pattern.permute.xlu0 0
  %329 = vperm.xlu0 %328, %v311
  %v330 = vpop.permute.xlu0 %329
  %v333 = vsel %vm196, %v303, 0
  %v336 = vsel %vm196, %v304, 0
  %v339 = vsel %vm196, %v305, 0
  %v342 = vsel %vm196, %v306, 0
  %344 = vmatprep.subr.mxu0 0.0
  %345 = vmatpush1.msra.mxu0 %v298
  %346 = vmatprep.subr.mxu0 0.0
  %347 = vmatpush1.msra.mxu0 %v299
  %348 = vmatprep.subr.mxu0 0.0
  %349 = vmatpush1.msra.mxu0 %v300
  %350 = vmatprep.subr.mxu0 0.0
  %351 = vmatpush1.msra.mxu0 %v301
  %352 = vmatprep.subr.mxu0 0.0
  %353 = vmatpush1.msra.mxu0 0.0
  %354 = vmatprep.subr.mxu0 0.0
  %355 = vmatpush1.msra.mxu0 0.0
  %356 = vmatprep.subr.mxu0 0.0
  %357 = vmatpush1.msra.mxu0 0.0
  %358 = vmatprep.subr.mxu0 0.0
  %359 = vmatpush1.msra.mxu0 0.0
  %360 = vmatprep.subr.mxu0 0.0
  %361 = vmatpush1.msra.mxu0 0.0
  %362 = vmatprep.subr.mxu0 0.0
  %363 = vmatpush1.msra.mxu0 0.0
  %364 = vmatprep.subr.mxu0 0.0
  %365 = vmatpush1.msra.mxu0 0.0
  %366 = vmatprep.subr.mxu0 0.0
  %367 = vmatpush1.msra.mxu0 0.0
  %368 = vmatprep.subr.mxu0 0.0
  %369 = vmatpush1.msra.mxu0 0.0
  %370 = vmatprep.subr.mxu0 0.0
  %371 = vmatpush1.msra.mxu0 0.0
  %372 = vmatprep.subr.mxu0 0.0
  %373 = vmatpush1.msra.mxu0 0.0
  %374 = vmatprep.subr.mxu0 0.0
  %375 = vmatpush1.msra.mxu0 0.0
  %376 = vmatprep.subr.mxu0 0.0
  %377 = vmatpush1.msra.mxu0 0.0
  %378 = vmatprep.subr.mxu0 0.0
  %379 = vmatpush1.msra.mxu0 0.0
  %380 = vmatprep.subr.mxu0 0.0
  %381 = vmatpush1.msra.mxu0 0.0
  %382 = vmatprep.subr.mxu0 0.0
  %383 = vmatpush1.msra.mxu0 0.0
  %384 = vmatprep.subr.mxu0 0.0
  %385 = vmatpush1.msra.mxu0 0.0
  %386 = vmatprep.subr.mxu0 0.0
  %387 = vmatpush1.msra.mxu0 0.0
  %388 = vmatprep.subr.mxu0 0.0
  %389 = vmatpush1.msra.mxu0 0.0
  %390 = vmatprep.subr.mxu0 0.0
  %391 = vmatpush1.msra.mxu0 0.0
  %392 = vmatprep.subr.mxu0 0.0
  %393 = vmatpush1.msra.mxu0 0.0
  %394 = vmatprep.subr.mxu0 0.0
  %395 = vmatpush1.msra.mxu0 0.0
  %396 = vmatprep.subr.mxu0 0.0
  %397 = vmatpush1.msra.mxu0 0.0
  %398 = vmatprep.subr.mxu0 0.0
  %399 = vmatpush1.msra.mxu0 0.0
  %400 = vmatprep.subr.mxu0 0.0
  %401 = vmatpush1.msra.mxu0 0.0
  %402 = vmatprep.subr.mxu0 0.0
  %403 = vmatpush1.msra.mxu0 0.0
  %404 = vmatprep.subr.mxu0 0.0
  %405 = vmatpush1.msra.mxu0 0.0
  %406 = vmatprep.subr.mxu0 0.0
  %407 = vmatpush1.msra.mxu0 0.0
  %408 = vmatprep.mubr.f32.mxu0 0.0
  %409 = vmatmul.mubr.f32.gmra.mrb[0].mxu0 %v333
  %v410 = vpop.f32.mrb[0].mxu0
  %v411 = vadd.f32 %v315, %v410
  %v412 = vpop.f32.mrb[0].mxu0
  %413 = vmatprep.mubr.f32.mxu0 0.0
  %414 = vmatmul.mubr.f32.gmra.mrb[0].mxu0 %v336
  %v415 = vpop.f32.mrb[0].mxu0
  %v416 = vadd.f32 %v320, %v415
  %v417 = vpop.f32.mrb[0].mxu0
  %418 = vmatprep.mubr.f32.mxu0 0.0
  %419 = vmatmul.mubr.f32.gmra.mrb[0].mxu0 %v339
  %v420 = vpop.f32.mrb[0].mxu0
  %v421 = vadd.f32 %v325, %v420
  %v422 = vpop.f32.mrb[0].mxu0
  %423 = vmatprep.mubr.f32.mxu0 0.0
  %424 = vmatmul.mubr.f32.gmra.mrb[0].mxu0 %v342
  %v425 = vpop.f32.mrb[0].mxu0
  %v426 = vadd.f32 %v330, %v425
  %v427 = vpop.f32.mrb[0].mxu0
  %428 = vdwg.mxu0
  %v429 = vmul.f32 %v411, 0.01
  %v430 = vmul.f32 %v416, 0.01
  %v431 = vmul.f32 %v421, 0.01
  %v432 = vmul.f32 %v426, 0.01
  %v433 = vmax.f32 %v411, %v429
  %v434 = vmax.f32 %v416, %v430
  %v435 = vmax.f32 %v421, %v431
  %v436 = vmax.f32 %v426, %v432
  %v437 = vld [vmem:[%s5] sm:$0xff]
  %v438 = vld [vmem:[%s5 + $0x8] sm:$0xff]
  %v439 = vld [vmem:[%s5 + $0x10] sm:$0xff]
  %v440 = vld [vmem:[%s5 + $0x18] sm:$0xff]
  %v441 = vld [vmem:[%s6] sm:$0x1]
  %v443 = vlaneseq
  %v444 = vshrl.u32 %v443, 7
  %v445 = vsub.s32 0, %v444
  %v446 = vrot.slane %v441, %v445
  %448 = vxpose.xlu0.b32.start [1/16] %v433, 128
  %449 = vxpose.xlu0.b32.cont [2/16] %v434, 128
  %450 = vxpose.xlu0.b32.cont [3/16] %v435, 128
  %451 = vxpose.xlu0.b32.cont [4/16] %v436, 128
  %452 = vxpose.xlu0.b32.cont [5/16] 0.0, 128
  %453 = vxpose.xlu0.b32.cont [6/16] 0.0, 128
  %454 = vxpose.xlu0.b32.cont [7/16] 0.0, 128
  %455 = vxpose.xlu0.b32.cont [8/16] 0.0, 128
  %456 = vxpose.xlu0.b32.cont [9/16] 0.0, 128
  %457 = vxpose.xlu0.b32.cont [10/16] 0.0, 128
  %458 = vxpose.xlu0.b32.cont [11/16] 0.0, 128
  %459 = vxpose.xlu0.b32.cont [12/16] 0.0, 128
  %460 = vxpose.xlu0.b32.cont [13/16] 0.0, 128
  %461 = vxpose.xlu0.b32.cont [14/16] 0.0, 128
  %462 = vxpose.xlu0.b32.cont [15/16] 0.0, 128
  %463 = vxpose.xlu0.b32.end [16/16] 0.0, 128
  %v464 = vpop.trf.xlu0
  %v465 = vpop.trf.xlu0
  %v466 = vpop.trf.xlu0
  %v467 = vpop.trf.xlu0
  %v468 = vpop.trf.xlu0
  %v469 = vpop.trf.xlu0
  %v470 = vpop.trf.xlu0
  %v471 = vpop.trf.xlu0
  %v472 = vpop.trf.xlu0
  %v473 = vpop.trf.xlu0
  %v474 = vpop.trf.xlu0
  %v475 = vpop.trf.xlu0
  %v476 = vpop.trf.xlu0
  %v477 = vpop.trf.xlu0
  %v478 = vpop.trf.xlu0
  %v479 = vpop.trf.xlu0
  %v481 = vsel %vm196, %v464, 0
  %v484 = vsel %vm196, %v465, 0
  %486 = vmatprep.subr.mxu0 0.0
  %487 = vmatpush1.msra.mxu0 %v437
  %488 = vmatprep.subr.mxu0 0.0
  %489 = vmatpush1.msra.mxu0 %v438
  %490 = vmatprep.subr.mxu0 0.0
  %491 = vmatpush1.msra.mxu0 %v439
  %492 = vmatprep.subr.mxu0 0.0
  %493 = vmatpush1.msra.mxu0 %v440
  %494 = vmatprep.subr.mxu0 0.0
  %495 = vmatpush1.msra.mxu0 0.0
  %496 = vmatprep.subr.mxu0 0.0
  %497 = vmatpush1.msra.mxu0 0.0
  %498 = vmatprep.subr.mxu0 0.0
  %499 = vmatpush1.msra.mxu0 0.0
  %500 = vmatprep.subr.mxu0 0.0
  %501 = vmatpush1.msra.mxu0 0.0
  %502 = vmatprep.subr.mxu0 0.0
  %503 = vmatpush1.msra.mxu0 0.0
  %504 = vmatprep.subr.mxu0 0.0
  %505 = vmatpush1.msra.mxu0 0.0
  %506 = vmatprep.subr.mxu0 0.0
  %507 = vmatpush1.msra.mxu0 0.0
  %508 = vmatprep.subr.mxu0 0.0
  %509 = vmatpush1.msra.mxu0 0.0
  %510 = vmatprep.subr.mxu0 0.0
  %511 = vmatpush1.msra.mxu0 0.0
  %512 = vmatprep.subr.mxu0 0.0
  %513 = vmatpush1.msra.mxu0 0.0
  %514 = vmatprep.subr.mxu0 0.0
  %515 = vmatpush1.msra.mxu0 0.0
  %516 = vmatprep.subr.mxu0 0.0
  %517 = vmatpush1.msra.mxu0 0.0
  %518 = vmatprep.subr.mxu0 0.0
  %519 = vmatpush1.msra.mxu0 0.0
  %520 = vmatprep.subr.mxu0 0.0
  %521 = vmatpush1.msra.mxu0 0.0
  %522 = vmatprep.subr.mxu0 0.0
  %523 = vmatpush1.msra.mxu0 0.0
  %524 = vmatprep.subr.mxu0 0.0
  %525 = vmatpush1.msra.mxu0 0.0
  %526 = vmatprep.subr.mxu0 0.0
  %527 = vmatpush1.msra.mxu0 0.0
  %528 = vmatprep.subr.mxu0 0.0
  %529 = vmatpush1.msra.mxu0 0.0
  %530 = vmatprep.subr.mxu0 0.0
  %531 = vmatpush1.msra.mxu0 0.0
  %532 = vmatprep.subr.mxu0 0.0
  %533 = vmatpush1.msra.mxu0 0.0
  %534 = vmatprep.subr.mxu0 0.0
  %535 = vmatpush1.msra.mxu0 0.0
  %536 = vmatprep.subr.mxu0 0.0
  %537 = vmatpush1.msra.mxu0 0.0
  %538 = vmatprep.subr.mxu0 0.0
  %539 = vmatpush1.msra.mxu0 0.0
  %540 = vmatprep.subr.mxu0 0.0
  %541 = vmatpush1.msra.mxu0 0.0
  %542 = vmatprep.subr.mxu0 0.0
  %543 = vmatpush1.msra.mxu0 0.0
  %544 = vmatprep.subr.mxu0 0.0
  %545 = vmatpush1.msra.mxu0 0.0
  %546 = vmatprep.subr.mxu0 0.0
  %547 = vmatpush1.msra.mxu0 0.0
  %548 = vmatprep.subr.mxu0 0.0
  %549 = vmatpush1.msra.mxu0 0.0
  %550 = vmatprep.mubr.f32.mxu0 0.0
  %551 = vmatmul.mubr.f32.gmra.mrb[0].mxu0 %v481
  %v552 = vpop.f32.mrb[0].mxu0
  %v553 = vadd.f32 %v446, %v552
  %v554 = vpop.f32.mrb[0].mxu0
  %555 = vmatprep.mubr.f32.mxu0 0.0
  %556 = vmatmul.mubr.f32.gmra.mrb[0].mxu0 %v484
  %v557 = vpop.f32.mrb[0].mxu0
  %v558 = vadd.f32 %v446, %v557
  %v559 = vpop.f32.mrb[0].mxu0
  %560 = vdwg.mxu0
  %561 = vst.msk [vmem:[%s7] sm:$0xff] %vm56, %v553
  %562 = vst.msk [vmem:[%s7 + $0x8] sm:$0xff] %vm56, %v558
  // Predicated region
  $region30: #{tpu_custom_call.1} parent=0 // pred_check
    _
  $region31: #{tpu_custom_call.1} parent=0 // pred_check_branch
    %564 = sbr.rel (0) target = $region33
  $region32: #{tpu_custom_call.1} parent=0 // pred_region
    _
  $region33: #{tpu_custom_call.1} parent=0 // pred_fallthru
    _
  // Predicated region
  $region34: #{tpu_custom_call.1} parent=0 // pred_check
    _
  $region35: #{tpu_custom_call.1} parent=0 // pred_check_branch
    %566 = sbr.rel (0) target = $region37
  $region36: #{tpu_custom_call.1} parent=0 // pred_region
    _
  $region37: #{tpu_custom_call.1} parent=0 // pred_fallthru
    _

</llo_original>
